<compile_context>
chip_gen: v7x
topology: tpu7x:2x2x1
jax: 0.10.0
libtpu: 0.0.40
codegen_flags: <defaults>
</compile_context>

<pallas_src>
import jax
import jax.numpy as jnp
from jax.experimental import pallas as pl
from jax.experimental.pallas import tpu as pltpu


def _adaptive_classifier_kernel(x_ref, w1_ref, b1_ref, w2_ref, b2_ref, o_ref):
    # x_ref : (TB, S, D)   w1_ref: (D, H)   b1_ref: (1, H)
    # w2_ref: (H, 1)       b2_ref: (1, 1)   o_ref : (TB, 1)
    pooled = jnp.max(x_ref[...], axis=1)                      # AdaptiveMaxPool1d(1)
    h = jnp.dot(pooled, w1_ref[...],
                preferred_element_type=jnp.float32) + b1_ref[...]
    h = jnp.maximum(h, 0.0)                                   # ReLU
    logits = jnp.dot(h, w2_ref[...],
                     preferred_element_type=jnp.float32) + b2_ref[...]
    o_ref[...] = jax.nn.sigmoid(logits).astype(o_ref.dtype)   # Sigmoid


def adaptive_classifier(x, w1_t, b1, w2_t, b2, *, batch_tile=512):
    """Fused AdaptiveClassifier forward.

    x    : (B, S, D) float32
    w1_t : (D, H)    float32   (PyTorch Linear weight (H, D) transposed)
    b1   : (1, H)    float32
    w2_t : (H, 1)    float32   (PyTorch Linear weight (1, H) transposed)
    b2   : (1, 1)    float32
    returns (B, 1) float32
    """
    B, S, D = x.shape
    H = w1_t.shape[1]

    # Batch tile: big enough to amortize per-step overhead, small enough that
    # double-buffered x tiles stay comfortably inside v7x's 64 MiB VMEM.
    TB = min(B, batch_tile)
    grid = (pl.cdiv(B, TB),)

    cost = pl.CostEstimate(
        flops=2 * B * D * H + 2 * B * H,
        transcendentals=B,  # sigmoid exp per output row
        bytes_accessed=4 * (B * S * D + D * H + H + H + 1 + B),
    )

    return pl.pallas_call(
        _adaptive_classifier_kernel,
        out_shape=jax.ShapeDtypeStruct((B, 1), jnp.float32),
        grid_spec=pl.GridSpec(
            grid=grid,
            in_specs=[
                pl.BlockSpec((TB, S, D), lambda i: (i, 0, 0)),   # x: tiled on batch
                pl.BlockSpec((D, H), lambda i: (0, 0)),          # w1: VMEM-resident
                pl.BlockSpec((1, H), lambda i: (0, 0)),          # b1
                pl.BlockSpec((H, 1), lambda i: (0, 0)),          # w2
                pl.BlockSpec((1, 1), lambda i: (0, 0)),          # b2
            ],
            out_specs=pl.BlockSpec((TB, 1), lambda i: (i, 0)),
        ),
        compiler_params=pltpu.CompilerParams(
            dimension_semantics=("parallel",),  # independent batch tiles (megacore)
        ),
        cost_estimate=cost,
    )(x, w1_t, b1, w2_t, b2)


if __name__ == "__main__":
    batch = 8
    seq = 8
    model_dim = 32
    hidden = 48

    key = jax.random.PRNGKey(0)
    kx, kw1, kb1, kw2, kb2 = jax.random.split(key, 5)

    # Deterministic params mimicking torch.nn.Linear default init.
    bnd1 = 1.0 / (model_dim ** 0.5)
    w1 = jax.random.uniform(kw1, (hidden, model_dim), jnp.float32, -bnd1, bnd1)
    b1 = jax.random.uniform(kb1, (hidden,), jnp.float32, -bnd1, bnd1)
    bnd2 = 1.0 / (hidden ** 0.5)
    w2 = jax.random.uniform(kw2, (1, hidden), jnp.float32, -bnd2, bnd2)
    b2 = jax.random.uniform(kb2, (1,), jnp.float32, -bnd2, bnd2)

    x = jax.random.normal(kx, (batch, seq, model_dim), jnp.float32)

    y = adaptive_classifier(
        x,
        w1.T,                 # (D, H)
        b1.reshape(1, -1),    # (1, H)
        w2.T,                 # (H, 1)
        b2.reshape(1, 1),     # (1, 1)
    )
    jax.block_until_ready(y)

    # Pure-JAX reference of the PyTorch forward pass.
    pooled_ref = jnp.max(x, axis=1)                              # (B, D)
    h_ref = jnp.maximum(pooled_ref @ w1.T + b1, 0.0)             # (B, H)
    y_ref = jax.nn.sigmoid(h_ref @ w2.T + b2)                    # (B, 1)

    assert y.shape == (batch, 1)
    assert jnp.allclose(y, y_ref, atol=1e-5, rtol=1e-5)

    print("KERNEL_OK")
</pallas_src>

<mosaic_0001>
module attributes {stable_mosaic.version = 11 : i64} {
  func.func @_adaptive_classifier_kernel(%arg0: i32, %arg1: memref<8x8x32xf32, #tpu.memory_space<vmem>>, %arg2: memref<32x48xf32, #tpu.memory_space<vmem>>, %arg3: memref<1x48xf32, #tpu.memory_space<vmem>>, %arg4: memref<48x1xf32, #tpu.memory_space<vmem>>, %arg5: memref<1x1xf32, #tpu.memory_space<vmem>>, %arg6: memref<8x1xf32, #tpu.memory_space<vmem>>) attributes {dimension_semantics = [#tpu.dimension_semantics<parallel>], iteration_bounds = array<i64: 1>, scalar_prefetch = 0 : i64, scratch_operands = 0 : i64, tpu.core_type = #tpu.core_type<tc>, window_params = [{transform_indices = @transform_0, window_bounds = array<i64: 8, 8, 32>}, {pipeline_mode = #tpu.pipeline_mode<synchronous>, transform_indices = @transform_1, window_bounds = array<i64: 32, 48>}, {pipeline_mode = #tpu.pipeline_mode<synchronous>, transform_indices = @transform_2, window_bounds = array<i64: 1, 48>}, {pipeline_mode = #tpu.pipeline_mode<synchronous>, transform_indices = @transform_3, window_bounds = array<i64: 48, 1>}, {pipeline_mode = #tpu.pipeline_mode<synchronous>, transform_indices = @transform_4, window_bounds = array<i64: 1, 1>}, {transform_indices = @transform_5, window_bounds = array<i64: 8, 1>}]} {
    %c0 = arith.constant 0 : index
    %c0_0 = arith.constant 0 : index
    %c0_1 = arith.constant 0 : index
    %0 = vector.load %arg1[%c0, %c0_0, %c0_1] : memref<8x8x32xf32, #tpu.memory_space<vmem>>, vector<8x8x32xf32>
    %cst = arith.constant dense<0xFF800000> : vector<8x32xf32>
    %1 = vector.multi_reduction <maximumf>, %0, %cst [1] : vector<8x8x32xf32> to vector<8x32xf32>
    %c0_2 = arith.constant 0 : index
    %c0_3 = arith.constant 0 : index
    %2 = vector.load %arg2[%c0_2, %c0_3] : memref<32x48xf32, #tpu.memory_space<vmem>>, vector<32x48xf32>
    %cst_4 = arith.constant dense<0.000000e+00> : vector<8x48xf32>
    %3 = tpu.matmul %1, %2, %cst_4 {dimension_numbers = #tpu.dot_dimension_numbers<[1], [0], [0], [1], [0, 0, 1, 1], [], []>} : vector<8x32xf32>, vector<32x48xf32>, vector<8x48xf32> -> vector<8x48xf32>
    %c0_5 = arith.constant 0 : index
    %c0_6 = arith.constant 0 : index
    %4 = vector.load %arg3[%c0_5, %c0_6] : memref<1x48xf32, #tpu.memory_space<vmem>>, vector<1x48xf32>
    %5 = vector.broadcast %4 : vector<1x48xf32> to vector<8x48xf32>
    %6 = arith.addf %3, %5 : vector<8x48xf32>
    %cst_7 = arith.constant 0.000000e+00 : f32
    %7 = vector.broadcast %cst_7 : f32 to vector<8x48xf32>
    %8 = arith.maximumf %6, %7 : vector<8x48xf32>
    %c0_8 = arith.constant 0 : index
    %c0_9 = arith.constant 0 : index
    %9 = vector.load %arg4[%c0_8, %c0_9] : memref<48x1xf32, #tpu.memory_space<vmem>>, vector<48x1xf32>
    %cst_10 = arith.constant dense<0.000000e+00> : vector<8x1xf32>
    %10 = tpu.matmul %8, %9, %cst_10 {dimension_numbers = #tpu.dot_dimension_numbers<[1], [0], [0], [1], [0, 0, 1, 1], [], []>} : vector<8x48xf32>, vector<48x1xf32>, vector<8x1xf32> -> vector<8x1xf32>
    %c0_11 = arith.constant 0 : index
    %c0_12 = arith.constant 0 : index
    %11 = vector.load %arg5[%c0_11, %c0_12] : memref<1x1xf32, #tpu.memory_space<vmem>>, vector<1x1xf32>
    %12 = vector.broadcast %11 : vector<1x1xf32> to vector<8x1xf32>
    %13 = arith.addf %10, %12 : vector<8x1xf32>
    %14 = arith.negf %13 : vector<8x1xf32>
    %15 = math.exp %14 : vector<8x1xf32>
    %cst_13 = arith.constant 1.000000e+00 : f32
    %16 = vector.broadcast %cst_13 : f32 to vector<8x1xf32>
    %17 = arith.addf %16, %15 : vector<8x1xf32>
    %18 = arith.divf %16, %17 : vector<8x1xf32>
    %c0_14 = arith.constant 0 : index
    %c0_15 = arith.constant 0 : index
    %19 = vector.load %arg6[%c0_14, %c0_15] : memref<8x1xf32, #tpu.memory_space<vmem>>, vector<8x1xf32>
    tpu.vector_store %arg6[%c0_14, %c0_15], %18 {strides = array<i32>} : memref<8x1xf32, #tpu.memory_space<vmem>>, vector<8x1xf32>,
    return
  }
  func.func @transform_0(%arg0: i32) -> (i32, i32, i32) {
    %c0_i32 = arith.constant 0 : i32
    %c0_i32_0 = arith.constant 0 : i32
    %c0_i32_1 = arith.constant 0 : i32
    return %arg0, %c0_i32, %c0_i32_0 : i32, i32, i32
  }
  func.func @transform_1(%arg0: i32) -> (i32, i32) {
    %c0_i32 = arith.constant 0 : i32
    %c0_i32_0 = arith.constant 0 : i32
    %c0_i32_1 = arith.constant 0 : i32
    return %c0_i32, %c0_i32_0 : i32, i32
  }
  func.func @transform_2(%arg0: i32) -> (i32, i32) {
    %c0_i32 = arith.constant 0 : i32
    %c0_i32_0 = arith.constant 0 : i32
    %c0_i32_1 = arith.constant 0 : i32
    return %c0_i32, %c0_i32_0 : i32, i32
  }
  func.func @transform_3(%arg0: i32) -> (i32, i32) {
    %c0_i32 = arith.constant 0 : i32
    %c0_i32_0 = arith.constant 0 : i32
    %c0_i32_1 = arith.constant 0 : i32
    return %c0_i32, %c0_i32_0 : i32, i32
  }
  func.func @transform_4(%arg0: i32) -> (i32, i32) {
    %c0_i32 = arith.constant 0 : i32
    %c0_i32_0 = arith.constant 0 : i32
    %c0_i32_1 = arith.constant 0 : i32
    return %c0_i32, %c0_i32_0 : i32, i32
  }
  func.func @transform_5(%arg0: i32) -> (i32, i32) {
    %c0_i32 = arith.constant 0 : i32
    %c0_i32_0 = arith.constant 0 : i32
    return %arg0, %c0_i32 : i32, i32
  }
}

</mosaic_0001>

<llo_original>
// kernel: tpu_custom_call.1
$region0: #{tpu_custom_call.1}
  #allocation0 [shape = 'u32[]', space=smem, size = 0x4, offset = 0x4, fixed_abs, tag = 'smem constant byte address 0x4 - core index']
  #allocation1 [shape = 'u32[144,128]{1,0:T(1,128)}', space=vmem, size = 0x12000, scoped, tag = 'internal scratch']
  #allocation2 [shape = 'f32[1,1]{1,0:T(1,128)S(1)}', space=vmem, size = 0x200, scoped, tag = 'scoped memory for tpu_custom_call.1']
  %s0 = inlined_call_operand.hbm [shape: f32[8,8,32], index: 0, kind: input, shape index: {}]
  %s1 = inlined_call_operand.vmem [shape: f32[32,48], index: 1, kind: input, shape index: {}]
  %s2 = inlined_call_operand.vmem [shape: f32[1,48], index: 2, kind: input, shape index: {}]
  %s3 = inlined_call_operand.vmem [shape: f32[48,1], index: 3, kind: input, shape index: {}]
  %s4 = inlined_call_operand.<no memory space> [shape: f32[1,1], index: 4, kind: input, shape index: {}]
  %s5 = inlined_call_operand.vmem [shape: f32[8,1], index: 5, kind: output, shape index: {}]
  %s6 = sld [smem:[#allocation0]]
  $region34: #{tpu_custom_call.1} parent=0
    _
  %s8 = ssub.s32 1, %s6
  %s9 = scalar_select 0, %s8, %s6
  %v10 = vstv %s4
  %11 = vst [vmem:[#allocation2] sm:$0x1] %v10
  $region1: #{tpu_custom_call.1} parent=0
    #allocation3 [shape = 'u8[32768]{0}', space=vmem, size = 0x8000, scoped, tag = 'input window, operand 0, single buffered']
    #allocation4 [shape = 's32[1]{0}', space=sflag, size = 0x4, scoped, tag = 'scoped memory for tpu_custom_call.1']
    %12 = vsyncpa [#allocation4], 0
    // Predicated region
    $region2: #{tpu_custom_call.1} parent=1 // pred_check
      _
    $region3: #{tpu_custom_call.1} parent=1 // pred_check_branch
      %14 = sbr.rel (0) target = $region5
    $region4: #{tpu_custom_call.1} parent=1 // pred_region
      %s16 = ssub.s32 1024, 1024
      %17 = vsyncadd [#allocation4], %s16
      %s18 = sshll.u32 [#allocation3], 4
      %s19 = int_to_ptr.vmem [resolvable:$true] %s18
      %24 = dma.hbm_to_vmem [thread:$0]  %s0, 1024, %s19, [#allocation4], 128, 128, 8
    $region5: #{tpu_custom_call.1} parent=1 // pred_fallthru
      _
    // Predicated region
    $region6: #{tpu_custom_call.1} parent=1 // pred_check
      _
    $region7: #{tpu_custom_call.1} parent=1 // pred_check_branch
      %26 = sbr.rel (0) target = $region9
    $region8: #{tpu_custom_call.1} parent=1 // pred_region
      _
    $region9: #{tpu_custom_call.1} parent=1 // pred_fallthru
      _
    // Predicated region
    $region10: #{tpu_custom_call.1} parent=1 // pred_check
      _
    $region11: #{tpu_custom_call.1} parent=1 // pred_check_branch
      %28 = sbr.rel (0) target = $region13
    $region12: #{tpu_custom_call.1} parent=1 // pred_region
      _
    $region13: #{tpu_custom_call.1} parent=1 // pred_fallthru
      _
    // Predicated region
    $region14: #{tpu_custom_call.1} parent=1 // pred_check
      _
    $region15: #{tpu_custom_call.1} parent=1 // pred_check_branch
      %30 = sbr.rel (0) target = $region17
    $region16: #{tpu_custom_call.1} parent=1 // pred_region
      _
    $region17: #{tpu_custom_call.1} parent=1 // pred_fallthru
      _
    // Predicated region
    $region18: #{tpu_custom_call.1} parent=1 // pred_check
      _
    $region19: #{tpu_custom_call.1} parent=1 // pred_check_branch
      %32 = sbr.rel (0) target = $region21
    $region20: #{tpu_custom_call.1} parent=1 // pred_region
      _
    $region21: #{tpu_custom_call.1} parent=1 // pred_fallthru
      _
    // Predicated region
    $region22: #{tpu_custom_call.1} parent=1 // pred_check
      _
    $region23: #{tpu_custom_call.1} parent=1 // pred_check_branch
      %34 = sbr.rel (0) target = $region25
    $region24: #{tpu_custom_call.1} parent=1 // pred_region
      %35 = dma.done [#allocation4], 1024
    $region25: #{tpu_custom_call.1} parent=1 // pred_fallthru
      _
    %v36 = vld [vmem:[#allocation3] sm:$0xff]
    %v37 = vld [vmem:[#allocation3 + $0x8] sm:$0xff]
    %v38 = vld [vmem:[#allocation3 + $0x10] sm:$0xff]
    %v39 = vld [vmem:[#allocation3 + $0x18] sm:$0xff]
    %v40 = vld [vmem:[#allocation3 + $0x20] sm:$0xff]
    %v41 = vld [vmem:[#allocation3 + $0x28] sm:$0xff]
    %v42 = vld [vmem:[#allocation3 + $0x30] sm:$0xff]
    %v43 = vld [vmem:[#allocation3 + $0x38] sm:$0xff]
    %vm44 = vcmask 261120
    %v45 = vsel %vm44, %v36, -inf
    %v46 = vrot.slane %v45, 4
    %v47 = vmax.f32 %v45, %v46
    %v48 = vrot.slane %v47, 2
    %v49 = vmax.f32 %v47, %v48
    %v50 = vrot.slane %v49, 1
    %v51 = vmax.f32 %v49, %v50
    %v52 = vsel %vm44, %v37, -inf
    %v53 = vrot.slane %v52, 4
    %v54 = vmax.f32 %v52, %v53
    %v55 = vrot.slane %v54, 2
    %v56 = vmax.f32 %v54, %v55
    %v57 = vrot.slane %v56, 1
    %v58 = vmax.f32 %v56, %v57
    %v59 = vsel %vm44, %v38, -inf
    %v60 = vrot.slane %v59, 4
    %v61 = vmax.f32 %v59, %v60
    %v62 = vrot.slane %v61, 2
    %v63 = vmax.f32 %v61, %v62
    %v64 = vrot.slane %v63, 1
    %v65 = vmax.f32 %v63, %v64
    %v66 = vsel %vm44, %v39, -inf
    %v67 = vrot.slane %v66, 4
    %v68 = vmax.f32 %v66, %v67
    %v69 = vrot.slane %v68, 2
    %v70 = vmax.f32 %v68, %v69
    %v71 = vrot.slane %v70, 1
    %v72 = vmax.f32 %v70, %v71
    %v73 = vsel %vm44, %v40, -inf
    %v74 = vrot.slane %v73, 4
    %v75 = vmax.f32 %v73, %v74
    %v76 = vrot.slane %v75, 2
    %v77 = vmax.f32 %v75, %v76
    %v78 = vrot.slane %v77, 1
    %v79 = vmax.f32 %v77, %v78
    %v80 = vsel %vm44, %v41, -inf
    %v81 = vrot.slane %v80, 4
    %v82 = vmax.f32 %v80, %v81
    %v83 = vrot.slane %v82, 2
    %v84 = vmax.f32 %v82, %v83
    %v85 = vrot.slane %v84, 1
    %v86 = vmax.f32 %v84, %v85
    %v87 = vsel %vm44, %v42, -inf
    %v88 = vrot.slane %v87, 4
    %v89 = vmax.f32 %v87, %v88
    %v90 = vrot.slane %v89, 2
    %v91 = vmax.f32 %v89, %v90
    %v92 = vrot.slane %v91, 1
    %v93 = vmax.f32 %v91, %v92
    %v94 = vsel %vm44, %v43, -inf
    %v95 = vrot.slane %v94, 4
    %v96 = vmax.f32 %v94, %v95
    %v97 = vrot.slane %v96, 2
    %v98 = vmax.f32 %v96, %v97
    %v99 = vrot.slane %v98, 1
    %v100 = vmax.f32 %v98, %v99
    %v101 = vld [vmem:[%s1] sm:$0xff]
    %v102 = vld [vmem:[%s1 + $0x8] sm:$0xff]
    %v103 = vld [vmem:[%s1 + $0x10] sm:$0xff]
    %v104 = vld [vmem:[%s1 + $0x18] sm:$0xff]
    %v105 = vld [vmem:[%s2] sm:$0x1]
    %v107 = vlaneseq
    %v108 = vshrl.u32 %v107, 7
    %v109 = vsub.s32 0, %v108
    %v110 = vrot.slane %v105, %v109
    %vm120 = vcmask 1041409
    %v121 = vsel %vm120, %v58, %v51
    %vm122 = vcmask 1042434
    %v123 = vsel %vm122, %v65, %v121
    %vm124 = vcmask 1043459
    %v125 = vsel %vm124, %v72, %v123
    %vm126 = vcmask 1044484
    %v127 = vsel %vm126, %v79, %v125
    %vm128 = vcmask 1045509
    %v129 = vsel %vm128, %v86, %v127
    %vm130 = vcmask 1046534
    %v131 = vsel %vm130, %v93, %v129
    %vm132 = vcmask 1047559
    %v133 = vsel %vm132, %v100, %v131
    %v134 = vsel %vm44, %v133, 0
    %136 = vmatprep.subr.mxu0 0.0
    %137 = vmatpush1.msra.mxu0 %v101
    %138 = vmatprep.subr.mxu0 0.0
    %139 = vmatpush1.msra.mxu0 %v102
    %140 = vmatprep.subr.mxu0 0.0
    %141 = vmatpush1.msra.mxu0 %v103
    %142 = vmatprep.subr.mxu0 0.0
    %143 = vmatpush1.msra.mxu0 %v104
    %144 = vmatprep.subr.mxu0 0.0
    %145 = vmatpush1.msra.mxu0 0.0
    %146 = vmatprep.subr.mxu0 0.0
    %147 = vmatpush1.msra.mxu0 0.0
    %148 = vmatprep.subr.mxu0 0.0
    %149 = vmatpush1.msra.mxu0 0.0
    %150 = vmatprep.subr.mxu0 0.0
    %151 = vmatpush1.msra.mxu0 0.0
    %152 = vmatprep.subr.mxu0 0.0
    %153 = vmatpush1.msra.mxu0 0.0
    %154 = vmatprep.subr.mxu0 0.0
    %155 = vmatpush1.msra.mxu0 0.0
    %156 = vmatprep.subr.mxu0 0.0
    %157 = vmatpush1.msra.mxu0 0.0
    %158 = vmatprep.subr.mxu0 0.0
    %159 = vmatpush1.msra.mxu0 0.0
    %160 = vmatprep.subr.mxu0 0.0
    %161 = vmatpush1.msra.mxu0 0.0
    %162 = vmatprep.subr.mxu0 0.0
    %163 = vmatpush1.msra.mxu0 0.0
    %164 = vmatprep.subr.mxu0 0.0
    %165 = vmatpush1.msra.mxu0 0.0
    %166 = vmatprep.subr.mxu0 0.0
    %167 = vmatpush1.msra.mxu0 0.0
    %168 = vmatprep.subr.mxu0 0.0
    %169 = vmatpush1.msra.mxu0 0.0
    %170 = vmatprep.subr.mxu0 0.0
    %171 = vmatpush1.msra.mxu0 0.0
    %172 = vmatprep.subr.mxu0 0.0
    %173 = vmatpush1.msra.mxu0 0.0
    %174 = vmatprep.subr.mxu0 0.0
    %175 = vmatpush1.msra.mxu0 0.0
    %176 = vmatprep.subr.mxu0 0.0
    %177 = vmatpush1.msra.mxu0 0.0
    %178 = vmatprep.subr.mxu0 0.0
    %179 = vmatpush1.msra.mxu0 0.0
    %180 = vmatprep.subr.mxu0 0.0
    %181 = vmatpush1.msra.mxu0 0.0
    %182 = vmatprep.subr.mxu0 0.0
    %183 = vmatpush1.msra.mxu0 0.0
    %184 = vmatprep.subr.mxu0 0.0
    %185 = vmatpush1.msra.mxu0 0.0
    %186 = vmatprep.subr.mxu0 0.0
    %187 = vmatpush1.msra.mxu0 0.0
    %188 = vmatprep.subr.mxu0 0.0
    %189 = vmatpush1.msra.mxu0 0.0
    %190 = vmatprep.subr.mxu0 0.0
    %191 = vmatpush1.msra.mxu0 0.0
    %192 = vmatprep.subr.mxu0 0.0
    %193 = vmatpush1.msra.mxu0 0.0
    %194 = vmatprep.subr.mxu0 0.0
    %195 = vmatpush1.msra.mxu0 0.0
    %196 = vmatprep.subr.mxu0 0.0
    %197 = vmatpush1.msra.mxu0 0.0
    %198 = vmatprep.subr.mxu0 0.0
    %199 = vmatpush1.msra.mxu0 0.0
    %200 = vmatprep.mubr.f32.mxu0 0.0
    %201 = vmatmul.mubr.f32.gmra.mrb[0].mxu0 %v134
    %v202 = vpop.f32.mrb[0].mxu0
    %v203 = vadd.f32 %v110, %v202
    %v204 = vpop.f32.mrb[0].mxu0
    %205 = vdwg.mxu0
    %v206 = vmax.f32 %v203, 0.0
    %v207 = vld [vmem:[%s3] sm:$0xff]
    %v208 = vld [vmem:[%s3 + $0x8] sm:$0xff]
    %v209 = vld [vmem:[%s3 + $0x10] sm:$0xff]
    %v210 = vld [vmem:[%s3 + $0x18] sm:$0xff]
    %v211 = vld [vmem:[%s3 + $0x20] sm:$0xff]
    %v212 = vld [vmem:[%s3 + $0x28] sm:$0xff]
    %v213 = vld [vmem:[#allocation2] sm:$0x1]
    %v215 = vlaneseq
    %v216 = vshrl.u32 %v215, 7
    %v217 = vsub.s32 0, %v216
    %v218 = vrot.slane %v213, %v217
    %vm220 = vcmask 392192
    %v222 = vsel %vm220, %v206, 0
    %224 = vmatprep.subr.mxu0 0.0
    %225 = vmatpush1.msra.mxu0 %v207
    %226 = vmatprep.subr.mxu0 0.0
    %227 = vmatpush1.msra.mxu0 %v208
    %228 = vmatprep.subr.mxu0 0.0
    %229 = vmatpush1.msra.mxu0 %v209
    %230 = vmatprep.subr.mxu0 0.0
    %231 = vmatpush1.msra.mxu0 %v210
    %232 = vmatprep.subr.mxu0 0.0
    %233 = vmatpush1.msra.mxu0 %v211
    %234 = vmatprep.subr.mxu0 0.0
    %235 = vmatpush1.msra.mxu0 %v212
    %236 = vmatprep.subr.mxu0 0.0
    %237 = vmatpush1.msra.mxu0 0.0
    %238 = vmatprep.subr.mxu0 0.0
    %239 = vmatpush1.msra.mxu0 0.0
    %240 = vmatprep.subr.mxu0 0.0
    %241 = vmatpush1.msra.mxu0 0.0
    %242 = vmatprep.subr.mxu0 0.0
    %243 = vmatpush1.msra.mxu0 0.0
    %244 = vmatprep.subr.mxu0 0.0
    %245 = vmatpush1.msra.mxu0 0.0
    %246 = vmatprep.subr.mxu0 0.0
    %247 = vmatpush1.msra.mxu0 0.0
    %248 = vmatprep.subr.mxu0 0.0
    %249 = vmatpush1.msra.mxu0 0.0
    %250 = vmatprep.subr.mxu0 0.0
    %251 = vmatpush1.msra.mxu0 0.0
    %252 = vmatprep.subr.mxu0 0.0
    %253 = vmatpush1.msra.mxu0 0.0
    %254 = vmatprep.subr.mxu0 0.0
    %255 = vmatpush1.msra.mxu0 0.0
    %256 = vmatprep.subr.mxu0 0.0
    %257 = vmatpush1.msra.mxu0 0.0
    %258 = vmatprep.subr.mxu0 0.0
    %259 = vmatpush1.msra.mxu0 0.0
    %260 = vmatprep.subr.mxu0 0.0
    %261 = vmatpush1.msra.mxu0 0.0
    %262 = vmatprep.subr.mxu0 0.0
    %263 = vmatpush1.msra.mxu0 0.0
    %264 = vmatprep.subr.mxu0 0.0
    %265 = vmatpush1.msra.mxu0 0.0
    %266 = vmatprep.subr.mxu0 0.0
    %267 = vmatpush1.msra.mxu0 0.0
    %268 = vmatprep.subr.mxu0 0.0
    %269 = vmatpush1.msra.mxu0 0.0
    %270 = vmatprep.subr.mxu0 0.0
    %271 = vmatpush1.msra.mxu0 0.0
    %272 = vmatprep.subr.mxu0 0.0
    %273 = vmatpush1.msra.mxu0 0.0
    %274 = vmatprep.subr.mxu0 0.0
    %275 = vmatpush1.msra.mxu0 0.0
    %276 = vmatprep.subr.mxu0 0.0
    %277 = vmatpush1.msra.mxu0 0.0
    %278 = vmatprep.subr.mxu0 0.0
    %279 = vmatpush1.msra.mxu0 0.0
    %280 = vmatprep.subr.mxu0 0.0
    %281 = vmatpush1.msra.mxu0 0.0
    %282 = vmatprep.subr.mxu0 0.0
    %283 = vmatpush1.msra.mxu0 0.0
    %284 = vmatprep.subr.mxu0 0.0
    %285 = vmatpush1.msra.mxu0 0.0
    %286 = vmatprep.subr.mxu0 0.0
    %287 = vmatpush1.msra.mxu0 0.0
    %288 = vmatprep.mubr.f32.mxu0 0.0
    %289 = vmatmul.mubr.f32.gmra.mrb[0].mxu0 %v222
    %v290 = vpop.f32.mrb[0].mxu0
    %v291 = vadd.f32 %v218, %v290
    %v292 = vpop.f32.mrb[0].mxu0
    %293 = vdwg.mxu0
    %v294 = vxor.u32 %v291, 2147483648
    %v295 = vmul.f32 %v294, 1.442695
    %v296 = vpow.pop %v295
    %v297 = vadd.f32 %v296, 1.0
    %v298 = vrcp.pop %v297
    %v299 = vmul.f32 1.0, %v298
    %vm300 = vcmask 7168
    %301 = vst.msk [vmem:[%s5] sm:$0xff] %vm300, %v299
    // Predicated region
    $region26: #{tpu_custom_call.1} parent=1 // pred_check
      _
    $region27: #{tpu_custom_call.1} parent=1 // pred_check_branch
      %303 = sbr.rel (0) target = $region29
    $region28: #{tpu_custom_call.1} parent=1 // pred_region
      _
    $region29: #{tpu_custom_call.1} parent=1 // pred_fallthru
      _
    // Predicated region
    $region30: #{tpu_custom_call.1} parent=1 // pred_check
      _
    $region31: #{tpu_custom_call.1} parent=1 // pred_check_branch
      %305 = sbr.rel (0) target = $region33
    $region32: #{tpu_custom_call.1} parent=1 // pred_region
      _
    $region33: #{tpu_custom_call.1} parent=1 // pred_fallthru
      _
    %306 = vsyncpa [#allocation4], 1

</llo_original>
